<compile_context>
chip_gen: v7x
topology: tpu7x:2x2x1
jax: 0.10.0
libtpu: 0.0.40
codegen_flags: <defaults>
</compile_context>

<pallas_src>
import math
import functools

import jax
import jax.numpy as jnp
from jax import lax
from jax.experimental import pallas as pl
from jax.experimental.pallas import tpu as pltpu


# ----------------------------------------------------------------------------
# Tiling helpers
# ----------------------------------------------------------------------------
def _sublane_base(dtype):
    """Native second-to-last-dim tile for a dtype (8 rows per 32-bit sublane)."""
    return 8 * (4 // jnp.dtype(dtype).itemsize)        # f32->8, bf16->16, int8->32


def _pick_tile(dim, target, base):
    """Largest tile <= target that divides dim and is a multiple of base.
    Falls back to the full dim, which is always a legal block size.
    NOTE: for very large dims with awkward factors this silently selects the
    full dim and may exceed VMEM; pad such inputs upstream."""
    if dim <= target:
        return dim
    t = (target // base) * base
    while t >= base:
        if dim % t == 0:
            return t
        t -= base
    return dim


def _default_exp_dtype():
    """bf16 softmax exp on v6e/v7x (bf16-capable EUP/VPU); f32 on v5e/older."""
    try:
        kind = jax.devices()[0].device_kind.lower()
    except Exception:
        return jnp.float32
    if any(tag in kind for tag in ("v6", "v7", "trillium")):
        return jnp.bfloat16
    return jnp.float32


# ----------------------------------------------------------------------------
# Tiled linear kernels: y = x @ w (+ b), with w already in (D_in, D_out) layout.
# ----------------------------------------------------------------------------
def _matmul_kernel(x_ref, w_ref, o_ref, acc_ref):
    k = pl.program_id(2)

    @pl.when(k == 0)
    def _():
        acc_ref[...] = jnp.zeros_like(acc_ref)

    acc_ref[...] += jnp.dot(x_ref[...], w_ref[...],
                            preferred_element_type=jnp.float32)

    @pl.when(k == pl.num_programs(2) - 1)
    def _():
        o_ref[...] = acc_ref[...].astype(o_ref.dtype)


def _matmul_bias_kernel(x_ref, w_ref, b_ref, o_ref, acc_ref):
    k = pl.program_id(2)

    @pl.when(k == 0)
    def _():
        acc_ref[...] = jnp.zeros_like(acc_ref)

    acc_ref[...] += jnp.dot(x_ref[...], w_ref[...],
                            preferred_element_type=jnp.float32)

    @pl.when(k == pl.num_programs(2) - 1)
    def _():
        o_ref[...] = (acc_ref[...] + b_ref[...]).astype(o_ref.dtype)


def pallas_linear(x, w, b=None, out_dtype=None, tm=512, tn=512, tk=1024):
    """x: (M, K), w: (K, N) pre-transposed, b: (1, N) or None -> (M, N).

    Default tiles (512, 512, 1024) in bf16 use ~6 MiB VMEM with double
    buffering, within even v5e's 16 MiB scoped default."""
    M, K = x.shape
    Kw, N = w.shape
    assert K == Kw
    tm = _pick_tile(M, tm, _sublane_base(x.dtype))
    tn = _pick_tile(N, tn, 128)
    tk = _pick_tile(K, tk, 128)
    grid = (M // tm, N // tn, K // tk)     # reduction (K) axis last

    in_specs = [
        pl.BlockSpec((tm, tk), lambda i, j, k: (i, k)),
        pl.BlockSpec((tk, tn), lambda i, j, k: (k, j)),
    ]
    args = [x, w]
    if b is None:
        kernel = _matmul_kernel            # no pointless zero-bias DMA / add
    else:
        kernel = _matmul_bias_kernel
        in_specs.append(pl.BlockSpec((1, tn), lambda i, j, k: (0, j)))
        args.append(b)

    return pl.pallas_call(
        kernel,
        out_shape=jax.ShapeDtypeStruct((M, N), out_dtype or x.dtype),
        grid=grid,
        in_specs=in_specs,
        out_specs=pl.BlockSpec((tm, tn), lambda i, j, k: (i, j)),
        scratch_shapes=[pltpu.VMEM((tm, tn), jnp.float32)],
        compiler_params=pltpu.CompilerParams(
            dimension_semantics=("parallel", "parallel", "arbitrary")),
    )(*args)


# ----------------------------------------------------------------------------
# Flash-style attention: KV-blocked online softmax, all heads per grid step.
# Inputs are token-major (B, S, D = H*d_k); the head split is a static lane
# slice inside the kernel; the output is a lane-dense (B, S, D) slab.
# The 1/sqrt(d_k) scale is already folded into the query projection weights.
# ----------------------------------------------------------------------------
def _flash_attn_kernel(q_ref, k_ref, v_ref, o_ref, m_sc, l_sc, acc_sc, *,
                       num_heads, d_k, exp_dtype):
    ki = pl.program_id(2)

    @pl.when(ki == 0)
    def _():
        m_sc[...] = jnp.full_like(m_sc, -jnp.inf)
        l_sc[...] = jnp.zeros_like(l_sc)
        acc_sc[...] = jnp.zeros_like(acc_sc)

    # Static unroll over heads.  Per-head operands are sliced directly from the
    # refs (no hoisted full-block loads), so the live set per head stays small
    # instead of spilling the whole Q/K/V tile through VMEM.
    for h in range(num_heads):
        lo, hi = h * d_k, (h + 1) * d_k
        q_h = q_ref[0, :, lo:hi]                           # (tq,  d_k) bf16
        k_h = k_ref[0, :, lo:hi]                           # (tkv, d_k) bf16
        # q_h @ k_h^T without materializing a transpose: contract last dims.
        s = lax.dot_general(q_h, k_h, (((1,), (1,)), ((), ())),
                            preferred_element_type=jnp.float32)   # (tq, tkv) f32
        m_prev = m_sc[h]                                   # (tq, 1) f32
        m_new = jnp.maximum(m_prev, jnp.max(s, axis=-1, keepdims=True))
        alpha = jnp.exp(m_prev - m_new)                    # (tq, 1) f32
        # exp in bf16 on v6e/v7x (EUP + spill savings); f32 path on v5e.
        p = jnp.exp((s - m_new).astype(exp_dtype))         # (tq, tkv)
        l_sc[h] = alpha * l_sc[h] + jnp.sum(
            p.astype(jnp.float32), axis=-1, keepdims=True)
        v_h = v_ref[0, :, lo:hi]                           # (tkv, d_k) bf16
        pv = jnp.dot(p.astype(v_h.dtype), v_h,
                     preferred_element_type=jnp.float32)   # (tq, d_k) f32
        acc_sc[:, lo:hi] = alpha * acc_sc[:, lo:hi] + pv
        m_sc[h] = m_new

    @pl.when(ki == pl.num_programs(2) - 1)
    def _():
        # One lane-dense (tq, D) store instead of H masked d_k-wide stores.
        parts = [acc_sc[:, h * d_k:(h + 1) * d_k] *
                 pl.reciprocal(l_sc[h], approx=True)       # EUP slot
                 for h in range(num_heads)]
        o_ref[0] = jnp.concatenate(parts, axis=-1).astype(o_ref.dtype)


def _flash_attention_call(args, in_specs, B, S, D, H, Dk, out_dtype,
                          tq, tkv, exp_dtype):
    grid = (B, S // tq, S // tkv)          # KV (reduction) axis last
    kernel = functools.partial(_flash_attn_kernel, num_heads=H, d_k=Dk,
                               exp_dtype=exp_dtype)
    return pl.pallas_call(
        kernel,
        out_shape=jax.ShapeDtypeStruct((B, S, D), out_dtype),
        grid=grid,
        in_specs=in_specs,
        out_specs=pl.BlockSpec((1, tq, D), lambda b, qi, ki: (b, qi, 0)),
        scratch_shapes=[pltpu.VMEM((H, tq, 1), jnp.float32),   # running max m
                        pltpu.VMEM((H, tq, 1), jnp.float32),   # running sum l
                        pltpu.VMEM((tq, D), jnp.float32)],     # dense accumulator
        compiler_params=pltpu.CompilerParams(
            dimension_semantics=("parallel", "parallel", "arbitrary")),
    )(*args)


def pallas_flash_attention(q, k, v, num_heads, tq=512, tkv=256,
                           exp_dtype=None, kv_buffers=None):
    """q, k, v: (B, S, D) post-projection; head split done inside the kernel."""
    B, S, D = q.shape
    Dk = D // num_heads
    base = _sublane_base(q.dtype)
    tq = _pick_tile(S, tq, base)
    tkv = _pick_tile(S, tkv, base)
    exp_dtype = exp_dtype or _default_exp_dtype()
    # Optional deeper K/V buffering (v6e DMA-bound regime): kv_buffers=3.
    kv_kwargs = {} if kv_buffers is None else dict(
        pipeline_mode=pl.Buffered(kv_buffers))
    q_spec = pl.BlockSpec((1, tq, D), lambda b, qi, ki: (b, qi, 0))
    kv_spec = pl.BlockSpec((1, tkv, D), lambda b, qi, ki: (b, ki, 0), **kv_kwargs)
    return _flash_attention_call([q, k, v], [q_spec, kv_spec, kv_spec],
                                 B, S, D, num_heads, Dk, q.dtype, tq, tkv,
                                 exp_dtype)


def pallas_flash_attention_fused_qkv(qkv, num_heads, tq=512, tkv=256,
                                     exp_dtype=None, kv_buffers=None):
    """qkv: (B, S, 3*D) with [q | k | v] concatenated along the last axis.
    The kernel reads each part zero-copy via its own BlockSpec (requires
    D % 128 == 0 so the D-wide last-dim blocks are legal)."""
    B, S, D3 = qkv.shape
    D = D3 // 3
    Dk = D // num_heads
    base = _sublane_base(qkv.dtype)
    tq = _pick_tile(S, tq, base)
    tkv = _pick_tile(S, tkv, base)
    exp_dtype = exp_dtype or _default_exp_dtype()
    kv_kwargs = {} if kv_buffers is None else dict(
        pipeline_mode=pl.Buffered(kv_buffers))
    q_spec = pl.BlockSpec((1, tq, D), lambda b, qi, ki: (b, qi, 0))
    k_spec = pl.BlockSpec((1, tkv, D), lambda b, qi, ki: (b, ki, 1), **kv_kwargs)
    v_spec = pl.BlockSpec((1, tkv, D), lambda b, qi, ki: (b, ki, 2), **kv_kwargs)
    return _flash_attention_call([qkv, qkv, qkv], [q_spec, k_spec, v_spec],
                                 B, S, D, num_heads, Dk, qkv.dtype, tq, tkv,
                                 exp_dtype)


# ----------------------------------------------------------------------------
# MultiHeadAttention module (forward only)
# ----------------------------------------------------------------------------
class MultiHeadAttentionPallas:
    def __init__(self, attention_head, model_dimension, key,
                 compute_dtype=jnp.bfloat16):
        assert model_dimension % attention_head == 0
        self.attention_head = attention_head
        self.model_dimension = model_dimension
        self.d_k = model_dimension // attention_head
        self.compute_dtype = compute_dtype

        kq, kk, kv, ko, kb = jax.random.split(key, 5)
        bound = 1.0 / math.sqrt(model_dimension)      # nn.Linear default init
        shape = (model_dimension, model_dimension)    # (out_features, in_features)
        self.W_q = jax.random.uniform(kq, shape, jnp.float32, -bound, bound)
        self.W_k = jax.random.uniform(kk, shape, jnp.float32, -bound, bound)
        self.W_v = jax.random.uniform(kv, shape, jnp.float32, -bound, bound)
        self.W_o = jax.random.uniform(ko, shape, jnp.float32, -bound, bound)
        self.b_o = jax.random.uniform(kb, (1, model_dimension), jnp.float32,
                                      -bound, bound)

        # Kernel-side weights: pre-transposed to (in, out) so the matmul kernel
        # never transposes, cast to bf16 for the MXU, and the 1/sqrt(d_k)
        # attention scale folded into W_q.
        scale = 1.0 / math.sqrt(self.d_k)
        self._wq = (self.W_q.T * scale).astype(compute_dtype)
        self._wk = self.W_k.T.astype(compute_dtype)
        self._wv = self.W_v.T.astype(compute_dtype)
        self._wo = self.W_o.T.astype(compute_dtype)
        self._bo = self.b_o                            # bias added in f32
        # Fused (D, 3D) projection weight for the self-attention fast path.
        self._wqkv = jnp.concatenate([self._wq, self._wk, self._wv], axis=1)

    def __call__(self, Q, K, V, mask=None, tq=512, tkv=256):
        if mask is not None:
            # TODO(synk): optional boolean attention mask (mask==0 -> -1e9) is
            # not wired into the flash kernel yet.
            raise NotImplementedError("attention mask not supported")
        B, S, D = Q.shape
        H = self.attention_head
        cd = self.compute_dtype

        if (Q is K) and (K is V) and (D % 128 == 0):
            # Self-attention fast path: one fused projection (activation read
            # from HBM once), attention reads q/k/v zero-copy from the fused
            # (B, S, 3D) result.
            x2 = Q.reshape(B * S, D).astype(cd)
            qkv = pallas_linear(x2, self._wqkv, out_dtype=cd).reshape(B, S, 3 * D)
            attn = pallas_flash_attention_fused_qkv(qkv, H, tq=tq, tkv=tkv)
        else:
            # Q/K/V may be distinct tensors (cross-attention): three
            # projections, each consumed by attention in token-major layout.
            q2 = Q.reshape(B * S, D).astype(cd)
            k2 = K.reshape(B * S, D).astype(cd)
            v2 = V.reshape(B * S, D).astype(cd)
            qp = pallas_linear(q2, self._wq, out_dtype=cd).reshape(B, S, D)
            kp = pallas_linear(k2, self._wk, out_dtype=cd).reshape(B, S, D)
            vp = pallas_linear(v2, self._wv, out_dtype=cd).reshape(B, S, D)
            attn = pallas_flash_attention(qp, kp, vp, H, tq=tq, tkv=tkv)

        out = pallas_linear(attn.reshape(B * S, D), self._wo, b=self._bo,
                            out_dtype=jnp.float32)
        return out.reshape(B, S, D)


# ----------------------------------------------------------------------------
# Pure-JAX f32 reference for the correctness check
# ----------------------------------------------------------------------------
def reference_forward(mha, Q, K, V):
    B, S, D = Q.shape
    H, Dk = mha.attention_head, mha.d_k

    def split(x):
        return x.reshape(B, S, H, Dk).transpose(0, 2, 1, 3)

    qh = split(Q @ mha.W_q.T)
    kh = split(K @ mha.W_k.T)
    vh = split(V @ mha.W_v.T)
    s = jnp.einsum("bhqd,bhkd->bhqk", qh, kh) / math.sqrt(Dk)
    p = jax.nn.softmax(s, axis=-1)
    o = jnp.einsum("bhqk,bhkd->bhqd", p, vh)
    o = o.transpose(0, 2, 1, 3).reshape(B, S, D)
    return o @ mha.W_o.T + mha.b_o[0]


if __name__ == "__main__":
    key = jax.random.PRNGKey(0)

    # (mode, B, S, D, H, attention-tile overrides)
    configs = [
        ("cross", 2, 8, 32, 4, dict()),                    # tiny spec-implied shape
        ("cross", 2, 256, 256, 4, dict(tq=128, tkv=128)),  # multi-KV-block path
        ("self", 2, 256, 256, 4, dict()),                  # fused-QKV fast path
    ]
    for idx, (mode, B, S, D, H, attn_tiles) in enumerate(configs):
        k_params, kq, kk, kv = jax.random.split(jax.random.fold_in(key, idx), 4)
        mha = MultiHeadAttentionPallas(attention_head=H, model_dimension=D,
                                       key=k_params)
        if mode == "self":
            X = jax.random.normal(kq, (B, S, D), jnp.float32)
            Q = K = V = X
        else:
            Q = jax.random.normal(kq, (B, S, D), jnp.float32)
            K = jax.random.normal(kk, (B, S, D), jnp.float32)
            V = jax.random.normal(kv, (B, S, D), jnp.float32)

        out = jax.block_until_ready(mha(Q, K, V, **attn_tiles))
        ref = reference_forward(mha, Q, K, V)
        assert out.shape == (B, S, D)
        max_err = float(jnp.max(jnp.abs(out - ref)))
        assert jnp.allclose(out, ref, atol=2e-2, rtol=2e-2), (
            f"[{mode}] mismatch vs JAX reference at {(B, S, D)}: "
            f"max |err| = {max_err}")

    print("KERNEL_OK")
</pallas_src>

<mosaic_0001>
module attributes {stable_mosaic.version = 11 : i64} {
  func.func @_matmul_kernel(%arg0: i32, %arg1: i32, %arg2: i32, %arg3: memref<16x32xbf16, #tpu.memory_space<vmem>>, %arg4: memref<32x32xbf16, #tpu.memory_space<vmem>>, %arg5: memref<16x32xbf16, #tpu.memory_space<vmem>>, %arg6: memref<16x32xf32, #tpu.memory_space<vmem>>) attributes {dimension_semantics = [#tpu.dimension_semantics<parallel>, #tpu.dimension_semantics<parallel>, #tpu.dimension_semantics<arbitrary>], iteration_bounds = array<i64: 1, 1, 1>, scalar_prefetch = 0 : i64, scratch_operands = 1 : i64, tpu.core_type = #tpu.core_type<tc>, window_params = [{transform_indices = @transform_0, window_bounds = array<i64: 16, 32>}, {transform_indices = @transform_1, window_bounds = array<i64: 32, 32>}, {transform_indices = @transform_2, window_bounds = array<i64: 16, 32>}]} {
    %c0_i32 = arith.constant 0 : i32
    %0 = arith.cmpi eq, %arg2, %c0_i32 : i32
    %1 = arith.extui %0 : i1 to i32
    %c0_i32_0 = arith.constant 0 : i32
    %2 = arith.cmpi ne, %1, %c0_i32_0 : i32
    scf.if %2 {
      %cst_10 = arith.constant 0.000000e+00 : f32
      %12 = vector.broadcast %cst_10 : f32 to vector<16x32xf32>
      %c0_11 = arith.constant 0 : index
      %c0_12 = arith.constant 0 : index
      %13 = vector.load %arg6[%c0_11, %c0_12] : memref<16x32xf32, #tpu.memory_space<vmem>>, vector<16x32xf32>
      tpu.vector_store %arg6[%c0_11, %c0_12], %12 {strides = array<i32>} : memref<16x32xf32, #tpu.memory_space<vmem>>, vector<16x32xf32>,
    } else {
    }
    %c0 = arith.constant 0 : index
    %c0_1 = arith.constant 0 : index
    %3 = vector.load %arg6[%c0, %c0_1] : memref<16x32xf32, #tpu.memory_space<vmem>>, vector<16x32xf32>
    %c0_2 = arith.constant 0 : index
    %c0_3 = arith.constant 0 : index
    %4 = vector.load %arg3[%c0_2, %c0_3] : memref<16x32xbf16, #tpu.memory_space<vmem>>, vector<16x32xbf16>
    %c0_4 = arith.constant 0 : index
    %c0_5 = arith.constant 0 : index
    %5 = vector.load %arg4[%c0_4, %c0_5] : memref<32x32xbf16, #tpu.memory_space<vmem>>, vector<32x32xbf16>
    %cst = arith.constant dense<0.000000e+00> : vector<16x32xf32>
    %6 = tpu.matmul %4, %5, %cst {dimension_numbers = #tpu.dot_dimension_numbers<[1], [0], [0], [1], [0, 0, 1, 1], [], []>} : vector<16x32xbf16>, vector<32x32xbf16>, vector<16x32xf32> -> vector<16x32xf32>
    %7 = arith.addf %3, %6 : vector<16x32xf32>
    %c0_6 = arith.constant 0 : index
    %c0_7 = arith.constant 0 : index
    %8 = vector.load %arg6[%c0_6, %c0_7] : memref<16x32xf32, #tpu.memory_space<vmem>>, vector<16x32xf32>
    tpu.vector_store %arg6[%c0_6, %c0_7], %7 {strides = array<i32>} : memref<16x32xf32, #tpu.memory_space<vmem>>, vector<16x32xf32>,
    %c0_i32_8 = arith.constant 0 : i32
    %9 = arith.cmpi eq, %arg2, %c0_i32_8 : i32
    %10 = arith.extui %9 : i1 to i32
    %c0_i32_9 = arith.constant 0 : i32
    %11 = arith.cmpi ne, %10, %c0_i32_9 : i32
    scf.if %11 {
      %c0_10 = arith.constant 0 : index
      %c0_11 = arith.constant 0 : index
      %12 = vector.load %arg6[%c0_10, %c0_11] : memref<16x32xf32, #tpu.memory_space<vmem>>, vector<16x32xf32>
      %13 = arith.truncf %12 : vector<16x32xf32> to vector<16x32xbf16>
      %c0_12 = arith.constant 0 : index
      %c0_13 = arith.constant 0 : index
      %14 = vector.load %arg5[%c0_12, %c0_13] : memref<16x32xbf16, #tpu.memory_space<vmem>>, vector<16x32xbf16>
      tpu.vector_store %arg5[%c0_12, %c0_13], %13 {strides = array<i32>} : memref<16x32xbf16, #tpu.memory_space<vmem>>, vector<16x32xbf16>,
    } else {
    }
    return
  }
  func.func @transform_0(%arg0: i32, %arg1: i32, %arg2: i32) -> (i32, i32) {
    %c0_i32 = arith.constant 0 : i32
    return %arg0, %arg2 : i32, i32
  }
  func.func @transform_1(%arg0: i32, %arg1: i32, %arg2: i32) -> (i32, i32) {
    %c0_i32 = arith.constant 0 : i32
    return %arg2, %arg1 : i32, i32
  }
  func.func @transform_2(%arg0: i32, %arg1: i32, %arg2: i32) -> (i32, i32) {
    %c0_i32 = arith.constant 0 : i32
    return %arg0, %arg1 : i32, i32
  }
}

</mosaic_0001>

<llo_original>
// kernel: tpu_custom_call.1
$region0: #{tpu_custom_call.1}
  #allocation0 [shape = 'u32[]', space=smem, size = 0x4, offset = 0x4, fixed_abs, tag = 'smem constant byte address 0x4 - core index']
  #allocation1 [shape = 'u32[144,128]{1,0:T(1,128)}', space=vmem, size = 0x12000, scoped, tag = 'internal scratch']
  #allocation2 [shape = 'f32[16,32]{1,0:T(8,128)}', space=vmem, size = 0x2000, scoped, tag = 'scratch operand']
  %s0 = inlined_call_operand.hbm [shape: bf16[16,32], index: 0, kind: input, shape index: {}]
  %s1 = inlined_call_operand.hbm [shape: bf16[32,32], index: 1, kind: input, shape index: {}]
  %s2 = inlined_call_operand.hbm [shape: bf16[16,32], index: 2, kind: output, shape index: {}]
  %s3 = sld [smem:[#allocation0]]
  $region34: #{tpu_custom_call.1} parent=0
    _
  %s5 = ssub.s32 1, %s3
  %s6 = scalar_select 0, %s5, %s3
  $region1: #{tpu_custom_call.1} parent=0
    #allocation3 [shape = 'u8[4096]{0}', space=vmem, size = 0x1000, scoped, tag = 'input window, operand 0, single buffered']
    #allocation4 [shape = 's32[1]{0}', space=sflag, size = 0x4, scoped, tag = 'scoped memory for tpu_custom_call.1']
    #allocation5 [shape = 's32[1]{0}', space=sflag, size = 0x4, scoped, tag = 'scoped memory for tpu_custom_call.1']
    #allocation6 [shape = 'u8[8192]{0}', space=vmem, size = 0x2000, scoped, tag = 'input window, operand 1, single buffered']
    #allocation7 [shape = 's32[1]{0}', space=sflag, size = 0x4, scoped, tag = 'scoped memory for tpu_custom_call.1']
    #allocation8 [shape = 'u8[4096]{0}', space=vmem, size = 0x1000, scoped, tag = 'output window, operand 0, single buffered']
    %7 = vsyncpa [#allocation4], 0
    %8 = vsyncpa [#allocation7], 0
    %9 = vsyncpa [#allocation5], 0
    // Predicated region
    $region2: #{tpu_custom_call.1} parent=1 // pred_check
      _
    $region3: #{tpu_custom_call.1} parent=1 // pred_check_branch
      %11 = sbr.rel (0) target = $region5
    $region4: #{tpu_custom_call.1} parent=1 // pred_region
      %s13 = ssub.s32 128, 128
      %14 = vsyncadd [#allocation4], %s13
      %s15 = sshll.u32 [#allocation3], 4
      %s16 = int_to_ptr.vmem [resolvable:$true] %s15
      %21 = dma.hbm_to_vmem [thread:$0]  %s0, 128, %s16, [#allocation4], 64, 64, 4
    $region5: #{tpu_custom_call.1} parent=1 // pred_fallthru
      _
    // Predicated region
    $region6: #{tpu_custom_call.1} parent=1 // pred_check
      _
    $region7: #{tpu_custom_call.1} parent=1 // pred_check_branch
      %23 = sbr.rel (0) target = $region9
    $region8: #{tpu_custom_call.1} parent=1 // pred_region
      %s25 = ssub.s32 256, 256
      %26 = vsyncadd [#allocation7], %s25
      %s27 = sshll.u32 [#allocation6], 4
      %s28 = int_to_ptr.vmem [resolvable:$true] %s27
      %33 = dma.hbm_to_vmem [thread:$0]  %s1, 256, %s28, [#allocation7], 64, 64, 4
    $region9: #{tpu_custom_call.1} parent=1 // pred_fallthru
      _
    // Predicated region
    $region10: #{tpu_custom_call.1} parent=1 // pred_check
      _
    $region11: #{tpu_custom_call.1} parent=1 // pred_check_branch
      %35 = sbr.rel (0) target = $region13
    $region12: #{tpu_custom_call.1} parent=1 // pred_region
      %36 = dma.done [#allocation4], 128
    $region13: #{tpu_custom_call.1} parent=1 // pred_fallthru
      _
    // Predicated region
    $region14: #{tpu_custom_call.1} parent=1 // pred_check
      _
    $region15: #{tpu_custom_call.1} parent=1 // pred_check_branch
      %38 = sbr.rel (0) target = $region17
    $region16: #{tpu_custom_call.1} parent=1 // pred_region
      %39 = dma.done [#allocation7], 256
    $region17: #{tpu_custom_call.1} parent=1 // pred_fallthru
      _
    %p41 = scmp.eq.s32.totalorder 0, 0
    // Predicated region
    $region18: #{tpu_custom_call.1} parent=1 // pred_check
      %p42 = pneg %p41
    $region19: #{tpu_custom_call.1} parent=1 // pred_check_branch
      %44 = sbr.rel (%p42) target = $region21
    $region20: #{tpu_custom_call.1} parent=1 // pred_region
      %vm45 = vcmask 261120
      %46 = vst.msk [vmem:[#allocation2] sm:$0xff] %vm45, 0.0
      %47 = vst.msk [vmem:[#allocation2 + $0x8] sm:$0xff] %vm45, 0.0
    $region21: #{tpu_custom_call.1} parent=1 // pred_fallthru
      _
    %v48 = vld [vmem:[#allocation2] sm:$0xff]
    %v49 = vld [vmem:[#allocation2 + $0x8] sm:$0xff]
    %v50 = vld [vmem:[#allocation3] sm:$0xf]
    %v51 = vld [vmem:[#allocation3 + $0x4] sm:$0xf]
    %v52 = vld [vmem:[#allocation6] sm:$0xf]
    %v53 = vld [vmem:[#allocation6 + $0x4] sm:$0xf]
    %v54 = vld [vmem:[#allocation6 + $0x8] sm:$0xf]
    %v55 = vld [vmem:[#allocation6 + $0xc] sm:$0xf]
    %v58 = vunpack.c.l.b16 %v50
    %v59 = vunpack.c.l.b16 %v51
    %v60 = vpack.c.b16 %v59, %v58
    %v65 = vunpack.c.l.b16 %v52
    %v66 = vunpack.c.l.b16 %v53
    %v67 = vunpack.c.l.b16 %v54
    %v68 = vunpack.c.l.b16 %v55
    %v69 = vpack.c.b16 %v66, %v65
    %v70 = vpack.c.b16 %v68, %v67
    %vm73 = vcmask 261120
    %v75 = vsel %vm73, %v60, 0
    %77 = vmatprep.subr.bf16.mxu0 0
    %78 = vmatpush1.bf16.msra.mxu0 %v69
    %79 = vmatprep.subr.bf16.mxu0 0
    %80 = vmatpush1.bf16.msra.mxu0 %v70
    %81 = vmatprep.subr.bf16.mxu0 0
    %82 = vmatpush1.bf16.msra.mxu0 0
    %83 = vmatprep.subr.bf16.mxu0 0
    %84 = vmatpush1.bf16.msra.mxu0 0
    %85 = vmatprep.subr.bf16.mxu0 0
    %86 = vmatpush1.bf16.msra.mxu0 0
    %87 = vmatprep.subr.bf16.mxu0 0
    %88 = vmatpush1.bf16.msra.mxu0 0
    %89 = vmatprep.subr.bf16.mxu0 0
    %90 = vmatpush1.bf16.msra.mxu0 0
    %91 = vmatprep.subr.bf16.mxu0 0
    %92 = vmatpush1.bf16.msra.mxu0 0
    %93 = vmatprep.subr.bf16.mxu0 0
    %94 = vmatpush1.bf16.msra.mxu0 0
    %95 = vmatprep.subr.bf16.mxu0 0
    %96 = vmatpush1.bf16.msra.mxu0 0
    %97 = vmatprep.subr.bf16.mxu0 0
    %98 = vmatpush1.bf16.msra.mxu0 0
    %99 = vmatprep.subr.bf16.mxu0 0
    %100 = vmatpush1.bf16.msra.mxu0 0
    %101 = vmatprep.subr.bf16.mxu0 0
    %102 = vmatpush1.bf16.msra.mxu0 0
    %103 = vmatprep.subr.bf16.mxu0 0
    %104 = vmatpush1.bf16.msra.mxu0 0
    %105 = vmatprep.subr.bf16.mxu0 0
    %106 = vmatpush1.bf16.msra.mxu0 0
    %107 = vmatprep.subr.bf16.mxu0 0
    %108 = vmatpush1.bf16.msra.mxu0 0
    %109 = vmatprep.mubr.bf16.mxu0 0
    %110 = vmatmul.mubr.bf16.gmra.mrb[0].mxu0 %v75
    %v111 = vpop.f32.mrb[0].mxu0
    %v112 = vadd.f32 0.0, %v111
    %v113 = vpop.f32.mrb[0].mxu0
    %v114 = vpop.f32.mrb[0].mxu0
    %v115 = vadd.f32 0.0, %v114
    %v116 = vpop.f32.mrb[0].mxu0
    %117 = vdwg.mxu0
    %v118 = vadd.f32 %v48, %v112
    %v119 = vadd.f32 %v49, %v115
    %120 = vst.msk [vmem:[#allocation2] sm:$0xff] %vm73, %v118
    %121 = vst.msk [vmem:[#allocation2 + $0x8] sm:$0xff] %vm73, %v119
    // Predicated region
    $region22: #{tpu_custom_call.1} parent=1 // pred_check
      %p122 = pneg %p41
    $region23: #{tpu_custom_call.1} parent=1 // pred_check_branch
      %124 = sbr.rel (%p122) target = $region25
    $region24: #{tpu_custom_call.1} parent=1 // pred_region
      %v125 = vld [vmem:[#allocation2] sm:$0xff]
      %v126 = vld [vmem:[#allocation2 + $0x8] sm:$0xff]
      %v127 = vpack.c.bf16 %v126, %v125
      %v129 = vunpack.c.l.b16 %v127
      %v130 = vunpack.c.h.b16 %v127
      %v131 = vpack.c.b16 %v129, %v129
      %v132 = vpack.c.b16 %v130, %v130
      %vm135 = vcmask 257024
      %136 = vst.msk [vmem:[#allocation8] sm:$0xf] %vm135, %v131
      %137 = vst.msk [vmem:[#allocation8 + $0x4] sm:$0xf] %vm135, %v132
    $region25: #{tpu_custom_call.1} parent=1 // pred_fallthru
      _
    // Predicated region
    $region26: #{tpu_custom_call.1} parent=1 // pred_check
      _
    $region27: #{tpu_custom_call.1} parent=1 // pred_check_branch
      %139 = sbr.rel (0) target = $region29
    $region28: #{tpu_custom_call.1} parent=1 // pred_region
      %s141 = ssub.s32 128, 128
      %142 = vsyncadd [#allocation5], %s141
      %s143 = sshll.u32 [#allocation8], 4
      %s144 = int_to_ptr.vmem [resolvable:$true] %s143
      %149 = dma.vmem_to_hbm [thread:$0]  %s144, 128, %s2, [#allocation5], 64, 64, 4
    $region29: #{tpu_custom_call.1} parent=1 // pred_fallthru
      _
    // Predicated region
    $region30: #{tpu_custom_call.1} parent=1 // pred_check
      _
    $region31: #{tpu_custom_call.1} parent=1 // pred_check_branch
      %151 = sbr.rel (0) target = $region33
    $region32: #{tpu_custom_call.1} parent=1 // pred_region
      %152 = dma.done [#allocation5], 128
    $region33: #{tpu_custom_call.1} parent=1 // pred_fallthru
      _
    %153 = vsyncpa [#allocation4], 1
    %154 = vsyncpa [#allocation7], 1
    %155 = vsyncpa [#allocation5], 1

</llo_original>
